<compile_context>
chip_gen: v7x
topology: tpu7x:2x2x1
jax: 0.10.0
libtpu: 0.0.40
codegen_flags: <defaults>
</compile_context>

<pallas_src>
import functools

import jax
import jax.numpy as jnp
from jax.experimental import pallas as pl
from jax.experimental.pallas import tpu as pltpu

BN_EPS = 1e-5


def _round_up(x, m):
    return (x + m - 1) // m * m


def _fc_bn_relu_dropout_kernel(x_ref, w_ref, gamma_ref, beta_ref, bits_ref,
                               o_ref, acc_ref, *, keep_threshold, inv_batch):
    """Grid = (H tiles [parallel], K tiles [arbitrary, trailing reduction])."""
    k = pl.program_id(1)

    # ---- init accumulator at the start of the K reduction ----
    @pl.when(k == 0)
    def _():
        acc_ref[...] = jnp.zeros_like(acc_ref)

    # ---- Linear (bias cancelled by BN mean subtraction): partial matmul ----
    acc_ref[...] += jnp.dot(x_ref[...], w_ref[...],
                            preferred_element_type=jnp.float32)

    # ---- finalize: BatchNorm(train) + ReLU + Dropout on the last K step ----
    @pl.when(k == pl.num_programs(1) - 1)
    def _():
        y = acc_ref[...]                                      # (B, TILE_H) f32
        # One-pass biased batch statistics per feature column.
        mean = jnp.sum(y, axis=0, keepdims=True) * inv_batch
        mean_sq = jnp.sum(y * y, axis=0, keepdims=True) * inv_batch
        var = jnp.maximum(mean_sq - mean * mean, 0.0)
        inv_std = jax.lax.rsqrt(var + BN_EPS)                 # EUP
        # gamma/beta already carry the dropout 1/(1-p) scale (folded on host);
        # fold inv_std into gamma on the (1, TILE_H) row before broadcasting.
        y_bn = (y - mean) * (inv_std * gamma_ref[...]) + beta_ref[...]
        y_relu = jnp.maximum(y_bn, 0.0)
        # Integer-threshold dropout: P(keep) = 1 - p.
        keep = bits_ref[...] >= jnp.uint32(keep_threshold)
        o_ref[...] = jnp.where(keep, y_relu, 0.0).astype(o_ref.dtype)


def fc_batchnorm_relu_dropout(x, weight, bias, gamma, beta,
                              drop_probability=0.5, seed=0,
                              tile_h=512, tile_k=512):
    """Training-mode forward of nn.Sequential(Linear, BatchNorm1d, ReLU, Dropout).

    x:      (B, input_dim) float
    weight: (hidden, input_dim)   -- nn.Linear weight
    bias:   (hidden,)             -- nn.Linear bias (cancelled by BN, unused)
    gamma:  (hidden,)             -- BatchNorm1d weight
    beta:   (hidden,)             -- BatchNorm1d bias
    """
    del bias  # Exactly cancelled by the batch-mean subtraction in training BN.
    # TODO(synk): BatchNorm1d running_mean/running_var buffer updates (a
    # training-mode side effect) are not emitted; only the forward output is.

    B, d_in = x.shape
    H = weight.shape[0]

    p = float(drop_probability)
    scale = 1.0 / (1.0 - p) if p < 1.0 else 0.0   # p == 1 -> all-zero output
    keep_threshold = min(int(round(p * 2.0 ** 32)), 2 ** 32 - 1)

    # Lane-dense tiling: pad feature / contraction dims to tile multiples of 128.
    tile_h = min(tile_h, _round_up(H, 128))
    tile_k = min(tile_k, _round_up(d_in, 128))
    H_pad = _round_up(H, tile_h)
    D_pad = _round_up(d_in, tile_k)

    f32 = jnp.float32

    x_p = x.astype(f32)
    if D_pad != d_in:
        x_p = jnp.pad(x_p, ((0, 0), (0, D_pad - d_in)))

    w_t = weight.astype(f32).T                                 # (d_in, H)
    if D_pad != d_in or H_pad != H:
        w_t = jnp.pad(w_t, ((0, D_pad - d_in), (0, H_pad - H)))

    # Fold the dropout scale into the affine BN parameters (ReLU is positively
    # homogeneous, so relu(g*yh + b) * s == relu((s*g)*yh + s*b) for s >= 0).
    g_p = jnp.pad(gamma.astype(f32) * scale, (0, H_pad - H)).reshape(1, H_pad)
    b_p = jnp.pad(beta.astype(f32) * scale, (0, H_pad - H)).reshape(1, H_pad)

    # Host-side dropout randomness (statistically equivalent to torch Dropout).
    bits = jax.random.bits(jax.random.PRNGKey(seed), (B, H_pad),
                           dtype=jnp.uint32)

    grid = (H_pad // tile_h, D_pad // tile_k)
    kernel = functools.partial(_fc_bn_relu_dropout_kernel,
                               keep_threshold=keep_threshold,
                               inv_batch=1.0 / B)

    out = pl.pallas_call(
        kernel,
        out_shape=jax.ShapeDtypeStruct((B, H_pad), f32),
        grid_spec=pltpu.PrefetchScalarGridSpec(
            num_scalar_prefetch=0,
            grid=grid,
            in_specs=[
                pl.BlockSpec((B, tile_k), lambda j, k: (0, k)),       # x
                pl.BlockSpec((tile_k, tile_h), lambda j, k: (k, j)),  # W^T
                pl.BlockSpec((1, tile_h), lambda j, k: (0, j)),       # gamma*s
                pl.BlockSpec((1, tile_h), lambda j, k: (0, j)),       # beta*s
                pl.BlockSpec((B, tile_h), lambda j, k: (0, j)),       # rng bits
            ],
            out_specs=pl.BlockSpec((B, tile_h), lambda j, k: (0, j)),
            scratch_shapes=[pltpu.VMEM((B, tile_h), jnp.float32)],
        ),
        compiler_params=pltpu.CompilerParams(
            dimension_semantics=("parallel", "arbitrary")),
    )(x_p, w_t, g_p, b_p, bits)

    if H_pad != H:
        out = out[:, :H]
    return out


def _reference(x, weight, bias, gamma, beta, p, bits, keep_threshold):
    """Pure-JAX reference of the same training-mode forward (same RNG bits)."""
    y = x @ weight.T + bias
    mean = jnp.mean(y, axis=0, keepdims=True)
    var = jnp.mean((y - mean) ** 2, axis=0, keepdims=True)
    y = (y - mean) / jnp.sqrt(var + BN_EPS) * gamma + beta
    y = jnp.maximum(y, 0.0)
    keep = bits >= jnp.uint32(keep_threshold)
    return jnp.where(keep, y / (1.0 - p), 0.0)


if __name__ == "__main__":
    B, INPUT_DIM, HIDDEN = 8, 16, 32
    DROP_P = 0.5
    SEED = 0

    key = jax.random.PRNGKey(0)
    kx, kw, kb = jax.random.split(key, 3)

    x = jax.random.normal(kx, (B, INPUT_DIM), dtype=jnp.float32)

    # nn.Linear-style init: U(-1/sqrt(fan_in), 1/sqrt(fan_in)).
    bound = 1.0 / (INPUT_DIM ** 0.5)
    weight = jax.random.uniform(kw, (HIDDEN, INPUT_DIM), jnp.float32, -bound, bound)
    bias = jax.random.uniform(kb, (HIDDEN,), jnp.float32, -bound, bound)
    gamma = jnp.ones((HIDDEN,), jnp.float32)   # BatchNorm1d weight
    beta = jnp.zeros((HIDDEN,), jnp.float32)   # BatchNorm1d bias

    fwd = jax.jit(functools.partial(fc_batchnorm_relu_dropout,
                                    drop_probability=DROP_P, seed=SEED))
    out = jax.block_until_ready(fwd(x, weight, bias, gamma, beta))
    assert out.shape == (B, HIDDEN)

    # Sanity check against a pure-JAX reference using the same dropout bits.
    H_pad = _round_up(HIDDEN, 128)
    bits = jax.random.bits(jax.random.PRNGKey(SEED), (B, H_pad),
                           dtype=jnp.uint32)[:, :HIDDEN]
    thr = min(int(round(DROP_P * 2.0 ** 32)), 2 ** 32 - 1)
    ref = _reference(x, weight, bias, gamma, beta, DROP_P, bits, thr)
    assert jnp.allclose(out, ref, atol=1e-3, rtol=1e-3)

    print("KERNEL_OK")
</pallas_src>

<mosaic_0001>
module attributes {stable_mosaic.version = 11 : i64} {
  func.func @_fc_bn_relu_dropout_kernel(%arg0: i32, %arg1: i32, %arg2: memref<8x128xf32, #tpu.memory_space<vmem>>, %arg3: memref<128x128xf32, #tpu.memory_space<vmem>>, %arg4: memref<1x128xf32, #tpu.memory_space<vmem>>, %arg5: memref<1x128xf32, #tpu.memory_space<vmem>>, %arg6: memref<8x128xi32, #tpu.memory_space<vmem>>, %arg7: memref<8x128xf32, #tpu.memory_space<vmem>>, %arg8: memref<8x128xf32, #tpu.memory_space<vmem>>) attributes {dimension_semantics = [#tpu.dimension_semantics<parallel>, #tpu.dimension_semantics<arbitrary>], iteration_bounds = array<i64: 1, 1>, scalar_prefetch = 0 : i64, scratch_operands = 1 : i64, tpu.core_type = #tpu.core_type<tc>, window_params = [{transform_indices = @transform_0, window_bounds = array<i64: 8, 128>}, {transform_indices = @transform_1, window_bounds = array<i64: 128, 128>}, {transform_indices = @transform_2, window_bounds = array<i64: 1, 128>}, {transform_indices = @transform_3, window_bounds = array<i64: 1, 128>}, {transform_indices = @transform_4, window_bounds = array<i64: 8, 128>}, {transform_indices = @transform_5, window_bounds = array<i64: 8, 128>}]} {
    %c0_i32 = arith.constant 0 : i32
    %0 = arith.cmpi eq, %arg1, %c0_i32 : i32
    %1 = arith.extui %0 : i1 to i32
    %c0_i32_0 = arith.constant 0 : i32
    %2 = arith.cmpi ne, %1, %c0_i32_0 : i32
    scf.if %2 {
      %cst_10 = arith.constant 0.000000e+00 : f32
      %12 = vector.broadcast %cst_10 : f32 to vector<8x128xf32>
      %c0_11 = arith.constant 0 : index
      %c0_12 = arith.constant 0 : index
      %13 = vector.load %arg8[%c0_11, %c0_12] : memref<8x128xf32, #tpu.memory_space<vmem>>, vector<8x128xf32>
      tpu.vector_store %arg8[%c0_11, %c0_12], %12 {strides = array<i32>} : memref<8x128xf32, #tpu.memory_space<vmem>>, vector<8x128xf32>,
    } else {
    }
    %c0 = arith.constant 0 : index
    %c0_1 = arith.constant 0 : index
    %3 = vector.load %arg8[%c0, %c0_1] : memref<8x128xf32, #tpu.memory_space<vmem>>, vector<8x128xf32>
    %c0_2 = arith.constant 0 : index
    %c0_3 = arith.constant 0 : index
    %4 = vector.load %arg2[%c0_2, %c0_3] : memref<8x128xf32, #tpu.memory_space<vmem>>, vector<8x128xf32>
    %c0_4 = arith.constant 0 : index
    %c0_5 = arith.constant 0 : index
    %5 = vector.load %arg3[%c0_4, %c0_5] : memref<128x128xf32, #tpu.memory_space<vmem>>, vector<128x128xf32>
    %cst = arith.constant dense<0.000000e+00> : vector<8x128xf32>
    %6 = tpu.matmul %4, %5, %cst {dimension_numbers = #tpu.dot_dimension_numbers<[1], [0], [0], [1], [0, 0, 1, 1], [], []>} : vector<8x128xf32>, vector<128x128xf32>, vector<8x128xf32> -> vector<8x128xf32>
    %7 = arith.addf %3, %6 : vector<8x128xf32>
    %c0_6 = arith.constant 0 : index
    %c0_7 = arith.constant 0 : index
    %8 = vector.load %arg8[%c0_6, %c0_7] : memref<8x128xf32, #tpu.memory_space<vmem>>, vector<8x128xf32>
    tpu.vector_store %arg8[%c0_6, %c0_7], %7 {strides = array<i32>} : memref<8x128xf32, #tpu.memory_space<vmem>>, vector<8x128xf32>,
    %c0_i32_8 = arith.constant 0 : i32
    %9 = arith.cmpi eq, %arg1, %c0_i32_8 : i32
    %10 = arith.extui %9 : i1 to i32
    %c0_i32_9 = arith.constant 0 : i32
    %11 = arith.cmpi ne, %10, %c0_i32_9 : i32
    scf.if %11 {
      %c0_10 = arith.constant 0 : index
      %c0_11 = arith.constant 0 : index
      %12 = vector.load %arg8[%c0_10, %c0_11] : memref<8x128xf32, #tpu.memory_space<vmem>>, vector<8x128xf32>
      %cst_12 = arith.constant dense<0.000000e+00> : vector<128xf32>
      %13 = vector.multi_reduction <add>, %12, %cst_12 [0] : vector<8x128xf32> to vector<128xf32>
      %14 = vector.shape_cast %13 : vector<128xf32> to vector<1x128xf32>
      %cst_13 = arith.constant 1.250000e-01 : f32
      %15 = vector.broadcast %cst_13 : f32 to vector<1x128xf32>
      %16 = arith.mulf %14, %15 : vector<1x128xf32>
      %17 = arith.mulf %12, %12 : vector<8x128xf32>
      %cst_14 = arith.constant dense<0.000000e+00> : vector<128xf32>
      %18 = vector.multi_reduction <add>, %17, %cst_14 [0] : vector<8x128xf32> to vector<128xf32>
      %19 = vector.shape_cast %18 : vector<128xf32> to vector<1x128xf32>
      %cst_15 = arith.constant 1.250000e-01 : f32
      %20 = vector.broadcast %cst_15 : f32 to vector<1x128xf32>
      %21 = arith.mulf %19, %20 : vector<1x128xf32>
      %22 = arith.mulf %16, %16 : vector<1x128xf32>
      %23 = arith.subf %21, %22 : vector<1x128xf32>
      %cst_16 = arith.constant 0.000000e+00 : f32
      %24 = vector.broadcast %cst_16 : f32 to vector<1x128xf32>
      %25 = arith.maximumf %23, %24 : vector<1x128xf32>
      %cst_17 = arith.constant 9.99999974E-6 : f32
      %26 = vector.broadcast %cst_17 : f32 to vector<1x128xf32>
      %27 = arith.addf %25, %26 : vector<1x128xf32>
      %28 = math.rsqrt %27 : vector<1x128xf32>
      %29 = vector.broadcast %16 : vector<1x128xf32> to vector<8x128xf32>
      %30 = arith.subf %12, %29 : vector<8x128xf32>
      %c0_18 = arith.constant 0 : index
      %c0_19 = arith.constant 0 : index
      %31 = vector.load %arg4[%c0_18, %c0_19] : memref<1x128xf32, #tpu.memory_space<vmem>>, vector<1x128xf32>
      %32 = arith.mulf %28, %31 : vector<1x128xf32>
      %33 = vector.broadcast %32 : vector<1x128xf32> to vector<8x128xf32>
      %34 = arith.mulf %30, %33 : vector<8x128xf32>
      %c0_20 = arith.constant 0 : index
      %c0_21 = arith.constant 0 : index
      %35 = vector.load %arg5[%c0_20, %c0_21] : memref<1x128xf32, #tpu.memory_space<vmem>>, vector<1x128xf32>
      %36 = vector.broadcast %35 : vector<1x128xf32> to vector<8x128xf32>
      %37 = arith.addf %34, %36 : vector<8x128xf32>
      %cst_22 = arith.constant 0.000000e+00 : f32
      %38 = vector.broadcast %cst_22 : f32 to vector<8x128xf32>
      %39 = arith.maximumf %37, %38 : vector<8x128xf32>
      %c0_23 = arith.constant 0 : index
      %c0_24 = arith.constant 0 : index
      %40 = vector.load %arg6[%c0_23, %c0_24] : memref<8x128xi32, #tpu.memory_space<vmem>>, vector<8x128xi32>
      %c-2147483648_i32 = arith.constant -2147483648 : i32
      %41 = vector.broadcast %c-2147483648_i32 : i32 to vector<8x128xi32>
      %42 = arith.cmpi uge, %40, %41 : vector<8x128xi32>
      %cst_25 = arith.constant 0.000000e+00 : f32
      %43 = vector.broadcast %cst_25 : f32 to vector<8x128xf32>
      %44 = arith.select %42, %39, %43 : vector<8x128xi1>, vector<8x128xf32>
      %c0_26 = arith.constant 0 : index
      %c0_27 = arith.constant 0 : index
      %45 = vector.load %arg7[%c0_26, %c0_27] : memref<8x128xf32, #tpu.memory_space<vmem>>, vector<8x128xf32>
      tpu.vector_store %arg7[%c0_26, %c0_27], %44 {strides = array<i32>} : memref<8x128xf32, #tpu.memory_space<vmem>>, vector<8x128xf32>,
    } else {
    }
    return
  }
  func.func @transform_0(%arg0: i32, %arg1: i32) -> (i32, i32) {
    %c0_i32 = arith.constant 0 : i32
    %c0_i32_0 = arith.constant 0 : i32
    return %c0_i32, %arg1 : i32, i32
  }
  func.func @transform_1(%arg0: i32, %arg1: i32) -> (i32, i32) {
    %c0_i32 = arith.constant 0 : i32
    return %arg1, %arg0 : i32, i32
  }
  func.func @transform_2(%arg0: i32, %arg1: i32) -> (i32, i32) {
    %c0_i32 = arith.constant 0 : i32
    %c0_i32_0 = arith.constant 0 : i32
    return %c0_i32, %arg0 : i32, i32
  }
  func.func @transform_3(%arg0: i32, %arg1: i32) -> (i32, i32) {
    %c0_i32 = arith.constant 0 : i32
    %c0_i32_0 = arith.constant 0 : i32
    return %c0_i32, %arg0 : i32, i32
  }
  func.func @transform_4(%arg0: i32, %arg1: i32) -> (i32, i32) {
    %c0_i32 = arith.constant 0 : i32
    %c0_i32_0 = arith.constant 0 : i32
    return %c0_i32, %arg0 : i32, i32
  }
  func.func @transform_5(%arg0: i32, %arg1: i32) -> (i32, i32) {
    %c0_i32 = arith.constant 0 : i32
    %c0_i32_0 = arith.constant 0 : i32
    return %c0_i32, %arg0 : i32, i32
  }
}

</mosaic_0001>

<llo_original>
// kernel: fc_batchnorm_relu_dropout.1
$region0: #{fc_batchnorm_relu_dropout.1}
  #allocation0 [shape = 'u32[]', space=smem, size = 0x4, offset = 0x4, fixed_abs, tag = 'smem constant byte address 0x4 - core index']
  #allocation1 [shape = 'u32[144,128]{1,0:T(1,128)}', space=vmem, size = 0x12000, scoped, tag = 'internal scratch']
  #allocation2 [shape = 'f32[8,128]{1,0:T(8,128)}', space=vmem, size = 0x1000, scoped, tag = 'scratch operand']
  %s0 = inlined_call_operand.vmem [shape: f32[8,128], index: 0, kind: input, shape index: {}]
  %s1 = inlined_call_operand.vmem [shape: f32[128,128], index: 1, kind: input, shape index: {}]
  %s2 = inlined_call_operand.vmem [shape: f32[1,128], index: 2, kind: input, shape index: {}]
  %s3 = inlined_call_operand.vmem [shape: f32[1,128], index: 3, kind: input, shape index: {}]
  %s4 = inlined_call_operand.vmem [shape: u32[8,128], index: 4, kind: input, shape index: {}]
  %s5 = inlined_call_operand.hbm [shape: f32[8,128], index: 5, kind: output, shape index: {}]
  %s6 = sld [smem:[#allocation0]]
  $region38: #{fc_batchnorm_relu_dropout.1} parent=0
    _
  %s8 = ssub.s32 1, %s6
  %s9 = scalar_select 0, %s8, %s6
  $region1: #{fc_batchnorm_relu_dropout.1} parent=0
    #allocation3 [shape = 'u8[4096]{0}', space=vmem, size = 0x1000, scoped, tag = 'output window, operand 0, single buffered']
    #allocation4 [shape = 's32[1]{0}', space=sflag, size = 0x4, scoped, tag = 'scoped memory for fc_batchnorm_relu_dropout.1']
    %10 = vsyncpa [#allocation4], 0
    // Predicated region
    $region2: #{fc_batchnorm_relu_dropout.1} parent=1 // pred_check
      _
    $region3: #{fc_batchnorm_relu_dropout.1} parent=1 // pred_check_branch
      %12 = sbr.rel (0) target = $region5
    $region4: #{fc_batchnorm_relu_dropout.1} parent=1 // pred_region
      _
    $region5: #{fc_batchnorm_relu_dropout.1} parent=1 // pred_fallthru
      _
    // Predicated region
    $region6: #{fc_batchnorm_relu_dropout.1} parent=1 // pred_check
      _
    $region7: #{fc_batchnorm_relu_dropout.1} parent=1 // pred_check_branch
      %14 = sbr.rel (0) target = $region9
    $region8: #{fc_batchnorm_relu_dropout.1} parent=1 // pred_region
      _
    $region9: #{fc_batchnorm_relu_dropout.1} parent=1 // pred_fallthru
      _
    // Predicated region
    $region10: #{fc_batchnorm_relu_dropout.1} parent=1 // pred_check
      _
    $region11: #{fc_batchnorm_relu_dropout.1} parent=1 // pred_check_branch
      %16 = sbr.rel (0) target = $region13
    $region12: #{fc_batchnorm_relu_dropout.1} parent=1 // pred_region
      _
    $region13: #{fc_batchnorm_relu_dropout.1} parent=1 // pred_fallthru
      _
    // Predicated region
    $region14: #{fc_batchnorm_relu_dropout.1} parent=1 // pred_check
      _
    $region15: #{fc_batchnorm_relu_dropout.1} parent=1 // pred_check_branch
      %18 = sbr.rel (0) target = $region17
    $region16: #{fc_batchnorm_relu_dropout.1} parent=1 // pred_region
      _
    $region17: #{fc_batchnorm_relu_dropout.1} parent=1 // pred_fallthru
      _
    // Predicated region
    $region18: #{fc_batchnorm_relu_dropout.1} parent=1 // pred_check
      _
    $region19: #{fc_batchnorm_relu_dropout.1} parent=1 // pred_check_branch
      %20 = sbr.rel (0) target = $region21
    $region20: #{fc_batchnorm_relu_dropout.1} parent=1 // pred_region
      _
    $region21: #{fc_batchnorm_relu_dropout.1} parent=1 // pred_fallthru
      _
    %p21 = scmp.eq.s32.totalorder 0, 0
    // Predicated region
    $region22: #{fc_batchnorm_relu_dropout.1} parent=1 // pred_check
      %p22 = pneg %p21
    $region23: #{fc_batchnorm_relu_dropout.1} parent=1 // pred_check_branch
      %24 = sbr.rel (%p22) target = $region25
    $region24: #{fc_batchnorm_relu_dropout.1} parent=1 // pred_region
      %25 = vst [vmem:[#allocation2] sm:$0xff] 0.0
    $region25: #{fc_batchnorm_relu_dropout.1} parent=1 // pred_fallthru
      _
    %v26 = vld [vmem:[#allocation2] sm:$0xff]
    %v27 = vld [vmem:[%s0] sm:$0xff]
    %v28 = vld [vmem:[%s1] sm:$0xff]
    %v29 = vld [vmem:[%s1 + $0x8] sm:$0xff]
    %v30 = vld [vmem:[%s1 + $0x10] sm:$0xff]
    %v31 = vld [vmem:[%s1 + $0x18] sm:$0xff]
    %v32 = vld [vmem:[%s1 + $0x20] sm:$0xff]
    %v33 = vld [vmem:[%s1 + $0x28] sm:$0xff]
    %v34 = vld [vmem:[%s1 + $0x30] sm:$0xff]
    %v35 = vld [vmem:[%s1 + $0x38] sm:$0xff]
    %v36 = vld [vmem:[%s1 + $0x40] sm:$0xff]
    %v37 = vld [vmem:[%s1 + $0x48] sm:$0xff]
    %v38 = vld [vmem:[%s1 + $0x50] sm:$0xff]
    %v39 = vld [vmem:[%s1 + $0x58] sm:$0xff]
    %v40 = vld [vmem:[%s1 + $0x60] sm:$0xff]
    %v41 = vld [vmem:[%s1 + $0x68] sm:$0xff]
    %v42 = vld [vmem:[%s1 + $0x70] sm:$0xff]
    %v43 = vld [vmem:[%s1 + $0x78] sm:$0xff]
    %44 = vmatprep.subr.mxu0 0.0
    %45 = vmatpush1.msra.mxu0 %v28
    %46 = vmatprep.subr.mxu0 0.0
    %47 = vmatpush1.msra.mxu0 %v29
    %48 = vmatprep.subr.mxu0 0.0
    %49 = vmatpush1.msra.mxu0 %v30
    %50 = vmatprep.subr.mxu0 0.0
    %51 = vmatpush1.msra.mxu0 %v31
    %52 = vmatprep.subr.mxu0 0.0
    %53 = vmatpush1.msra.mxu0 %v32
    %54 = vmatprep.subr.mxu0 0.0
    %55 = vmatpush1.msra.mxu0 %v33
    %56 = vmatprep.subr.mxu0 0.0
    %57 = vmatpush1.msra.mxu0 %v34
    %58 = vmatprep.subr.mxu0 0.0
    %59 = vmatpush1.msra.mxu0 %v35
    %60 = vmatprep.subr.mxu0 0.0
    %61 = vmatpush1.msra.mxu0 %v36
    %62 = vmatprep.subr.mxu0 0.0
    %63 = vmatpush1.msra.mxu0 %v37
    %64 = vmatprep.subr.mxu0 0.0
    %65 = vmatpush1.msra.mxu0 %v38
    %66 = vmatprep.subr.mxu0 0.0
    %67 = vmatpush1.msra.mxu0 %v39
    %68 = vmatprep.subr.mxu0 0.0
    %69 = vmatpush1.msra.mxu0 %v40
    %70 = vmatprep.subr.mxu0 0.0
    %71 = vmatpush1.msra.mxu0 %v41
    %72 = vmatprep.subr.mxu0 0.0
    %73 = vmatpush1.msra.mxu0 %v42
    %74 = vmatprep.subr.mxu0 0.0
    %75 = vmatpush1.msra.mxu0 %v43
    %76 = vmatprep.subr.mxu0 0.0
    %77 = vmatpush1.msra.mxu0 0.0
    %78 = vmatprep.subr.mxu0 0.0
    %79 = vmatpush1.msra.mxu0 0.0
    %80 = vmatprep.subr.mxu0 0.0
    %81 = vmatpush1.msra.mxu0 0.0
    %82 = vmatprep.subr.mxu0 0.0
    %83 = vmatpush1.msra.mxu0 0.0
    %84 = vmatprep.subr.mxu0 0.0
    %85 = vmatpush1.msra.mxu0 0.0
    %86 = vmatprep.subr.mxu0 0.0
    %87 = vmatpush1.msra.mxu0 0.0
    %88 = vmatprep.subr.mxu0 0.0
    %89 = vmatpush1.msra.mxu0 0.0
    %90 = vmatprep.subr.mxu0 0.0
    %91 = vmatpush1.msra.mxu0 0.0
    %92 = vmatprep.subr.mxu0 0.0
    %93 = vmatpush1.msra.mxu0 0.0
    %94 = vmatprep.subr.mxu0 0.0
    %95 = vmatpush1.msra.mxu0 0.0
    %96 = vmatprep.subr.mxu0 0.0
    %97 = vmatpush1.msra.mxu0 0.0
    %98 = vmatprep.subr.mxu0 0.0
    %99 = vmatpush1.msra.mxu0 0.0
    %100 = vmatprep.subr.mxu0 0.0
    %101 = vmatpush1.msra.mxu0 0.0
    %102 = vmatprep.subr.mxu0 0.0
    %103 = vmatpush1.msra.mxu0 0.0
    %104 = vmatprep.subr.mxu0 0.0
    %105 = vmatpush1.msra.mxu0 0.0
    %106 = vmatprep.subr.mxu0 0.0
    %107 = vmatpush1.msra.mxu0 0.0
    %108 = vmatprep.mubr.f32.mxu0 0.0
    %109 = vmatmul.mubr.f32.gmra.mrb[0].mxu0 %v27
    %v110 = vpop.f32.mrb[0].mxu0
    %v111 = vadd.f32 0.0, %v110
    %v112 = vpop.f32.mrb[0].mxu0
    %113 = vdwg.mxu0
    %v114 = vadd.f32 %v26, %v111
    %115 = vst [vmem:[#allocation2] sm:$0xff] %v114
    // Predicated region
    $region26: #{fc_batchnorm_relu_dropout.1} parent=1 // pred_check
      %p116 = pneg %p21
    $region27: #{fc_batchnorm_relu_dropout.1} parent=1 // pred_check_branch
      %118 = sbr.rel (%p116) target = $region29
    $region28: #{fc_batchnorm_relu_dropout.1} parent=1 // pred_region
      %v119 = vld [vmem:[#allocation2] sm:$0xff]
      %v120 = vrot.slane %v119, 4
      %v121 = vadd.f32 %v119, %v120
      %v122 = vrot.slane %v121, 2
      %v123 = vadd.f32 %v121, %v122
      %v124 = vrot.slane %v123, 1
      %v125 = vadd.f32 %v123, %v124
      %v126 = vmul.f32 %v125, 0.125
      %v127 = vmul.f32 %v119, %v119
      %v128 = vrot.slane %v127, 4
      %v129 = vadd.f32 %v127, %v128
      %v130 = vrot.slane %v129, 2
      %v131 = vadd.f32 %v129, %v130
      %v132 = vrot.slane %v131, 1
      %v133 = vadd.f32 %v131, %v132
      %v134 = vmul.f32 %v133, 0.125
      %v135 = vmul.f32 %v126, %v126
      %v136 = vsub.f32 %v134, %v135
      %v137 = vmax.f32 %v136, 0.0
      %v138 = vadd.f32 %v137, 1e-05
      %v139 = vrsqrt.pop %v138
      %v140 = vsub.f32 %v119, %v126
      %v141 = vld [vmem:[%s2] sm:$0x1]
      %v142 = vmul.f32 %v139, %v141
      %v143 = vlaneseq
      %v144 = vshrl.u32 %v143, 7
      %v145 = vsub.s32 0, %v144
      %v146 = vrot.slane %v142, %v145
      %v147 = vmul.f32 %v140, %v146
      %v148 = vld [vmem:[%s3] sm:$0x1]
      %v150 = vlaneseq
      %v151 = vshrl.u32 %v150, 7
      %v152 = vsub.s32 0, %v151
      %v153 = vrot.slane %v148, %v152
      %v155 = vadd.f32 %v147, %v153
      %v156 = vmax.f32 %v155, 0.0
      %v157 = vld [vmem:[%s4] sm:$0xff]
      %vm158 = vcmp.ge.u32.totalorder %v157, 2147483648
      %v159 = vsel %vm158, %v156, 0.0
      %160 = vst [vmem:[#allocation3] sm:$0xff] %v159
    $region29: #{fc_batchnorm_relu_dropout.1} parent=1 // pred_fallthru
      _
    // Predicated region
    $region30: #{fc_batchnorm_relu_dropout.1} parent=1 // pred_check
      _
    $region31: #{fc_batchnorm_relu_dropout.1} parent=1 // pred_check_branch
      %162 = sbr.rel (0) target = $region33
    $region32: #{fc_batchnorm_relu_dropout.1} parent=1 // pred_region
      %s164 = ssub.s32 128, 128
      %165 = vsyncadd [#allocation4], %s164
      %s167 = sshll.u32 [#allocation3], 4
      %s168 = int_to_ptr.vmem [resolvable:$true] %s167
      %170 = dma.vmem_to_hbm [thread:$0]  %s168, 128, %s5, [#allocation4]
    $region33: #{fc_batchnorm_relu_dropout.1} parent=1 // pred_fallthru
      _
    // Predicated region
    $region34: #{fc_batchnorm_relu_dropout.1} parent=1 // pred_check
      _
    $region35: #{fc_batchnorm_relu_dropout.1} parent=1 // pred_check_branch
      %172 = sbr.rel (0) target = $region37
    $region36: #{fc_batchnorm_relu_dropout.1} parent=1 // pred_region
      %173 = dma.done [#allocation4], 128
    $region37: #{fc_batchnorm_relu_dropout.1} parent=1 // pred_fallthru
      _
    %174 = vsyncpa [#allocation4], 1

</llo_original>
